<compile_context>
chip_gen: v6e
topology: v6e:2x2x1
jax: 0.10.0
libtpu: 0.0.40
codegen_flags: <defaults>
</compile_context>

<pallas_src>
import jax
import jax.numpy as jnp
from jax.experimental import pallas as pl
from jax.experimental.pallas import tpu as pltpu


def _round_up(v, m):
    return (v + m - 1) // m * m


def _pad2(a, rows, cols):
    return jnp.pad(a, ((0, rows - a.shape[0]), (0, cols - a.shape[1])))


def _vmem_limit_bytes():
    # Per-generation scoped VMEM limit: half of physical, clamped to [32, 96] MiB.
    try:
        info = pltpu.get_tpu_info()
        phys = getattr(info, "vmem_capacity_bytes", None)
        if phys:
            return max(32 * 1024 * 1024, min(int(phys) // 2, 96 * 1024 * 1024))
    except Exception:
        pass
    return 32 * 1024 * 1024


def _resident(shape):
    # Whole array, same block every grid step -> VMEM-resident.  Buffered(1):
    # a constant index_map never re-fetches, so double-buffering it is waste.
    nd = len(shape)
    idx = lambda *args: (0,) * nd
    try:
        return pl.BlockSpec(shape, idx, pipeline_mode=pl.Buffered(1))
    except Exception:          # older jax without pipeline_mode / Buffered
        return pl.BlockSpec(shape, idx)


# ----------------------------------------------------------------------------
# Kernel 0 (only when F_in > H): XW1 = (dinv * X) @ W1, hoisted so it is not
# recomputed for every adjacency row tile.
# ----------------------------------------------------------------------------
def _xw1_kernel(xs_ref, w1_ref, xw1_ref):
    xw1_ref[...] = jnp.dot(xs_ref[...], w1_ref[...],
                           preferred_element_type=jnp.float32).astype(xw1_ref.dtype)


# ----------------------------------------------------------------------------
# Kernel 1: GCN layer 1 over one adjacency row tile.
#   h1 = relu( dinv * ((A+I) @ (dinv*X)) @ W1 + b1 )
# Output is dinv * h1 (the row-scaled operand layer 2 needs), bf16.
# Two variants chosen from the TRUE (unpadded) F_in vs H.
# ----------------------------------------------------------------------------
def _gcn1_xfirst_kernel(a_ref, xs_ref, w1_ref, b1_ref, dinv_ref, h1s_ref):
    # F_in <= H: contract the N^2-sized product against the narrower X first.
    ax = jnp.dot(a_ref[...], xs_ref[...], preferred_element_type=jnp.float32)
    hw = jnp.dot(ax.astype(jnp.bfloat16), w1_ref[...],
                 preferred_element_type=jnp.float32)
    d = dinv_ref[...]                                   # (tile_n, 1) f32
    h1 = jnp.maximum(d * hw + b1_ref[...], 0.0)         # bias + ReLU in f32
    h1s_ref[...] = (d * h1).astype(h1s_ref.dtype)


def _gcn1_aw_kernel(a_ref, xw1_ref, b1_ref, dinv_ref, h1s_ref):
    # F_in > H: XW1 was precomputed once by kernel 0.
    hw = jnp.dot(a_ref[...], xw1_ref[...], preferred_element_type=jnp.float32)
    d = dinv_ref[...]
    h1 = jnp.maximum(d * hw + b1_ref[...], 0.0)
    h1s_ref[...] = (d * h1).astype(h1s_ref.dtype)


# ----------------------------------------------------------------------------
# Kernel 2: GCN layer 2 + pooling partial sums.
# Grid = (n_splits, tiles_per_split): leading axis "parallel" (two v7x cores
# each build their own pooled partial), trailing axis "arbitrary" accumulates
# row tiles into a per-core f32 VMEM scratch.
# ----------------------------------------------------------------------------
def _gcn2_pool_kernel(a_ref, h1s_ref, pool_ref, dinv_ref, w2_ref, b2_ref,
                      part_ref, acc_ref):
    j = pl.program_id(1)

    @pl.when(j == 0)
    def _():
        acc_ref[...] = jnp.zeros_like(acc_ref)

    ah1 = jnp.dot(a_ref[...], h1s_ref[...],
                  preferred_element_type=jnp.float32)              # (tile_n, Hp)
    h2 = jnp.dot((dinv_ref[...] * ah1).astype(jnp.bfloat16), w2_ref[...],
                 preferred_element_type=jnp.float32) + b2_ref[...]  # (tile_n, Hp)
    # pooling: exact 0/1 bf16 one-hot tile @ bf16 h2, f32 accumulation.
    acc_ref[...] += jnp.dot(pool_ref[...], h2.astype(jnp.bfloat16),
                            preferred_element_type=jnp.float32)    # (Bp, Hp)
    part_ref[0] = acc_ref[...]


# ----------------------------------------------------------------------------
# Kernel 3: reduce per-core pooled partials, divide by per-graph counts (f32),
# projector Linear -> Sigmoid -> Linear.
# ----------------------------------------------------------------------------
def _finalize_kernel(part_ref, invc_ref, wp1_ref, bp1_ref, wp2_ref, bp2_ref,
                     out_ref):
    pooled = jnp.sum(part_ref[...], axis=0) * invc_ref[...]        # (Bp, Hp)
    z = jnp.dot(pooled.astype(jnp.bfloat16), wp1_ref[...],
                preferred_element_type=jnp.float32) + bp1_ref[...]
    z = jax.nn.sigmoid(z)
    proj = jnp.dot(z.astype(jnp.bfloat16), wp2_ref[...],
                   preferred_element_type=jnp.float32) + bp2_ref[...]
    out_ref[...] = proj.astype(out_ref.dtype)


# ----------------------------------------------------------------------------
# Wrapper
# ----------------------------------------------------------------------------
def g_retriever_forward(x, edge_index, batch, params, *, num_graphs,
                        mlp_out_tokens, embedding_dim, tile_n=256):
    assert tile_n % 128 == 0, "tile_n must be a multiple of 128 (lane-dense tiles)"
    n, f_in = x.shape
    (w1, b1, w2, b2, wp1, bp1, wp2, bp2) = params
    h = w1.shape[1]
    t_d = wp2.shape[1]

    # Raw 0/1 adjacency with self-loops (exact in bf16); GCN normalization is
    # applied through the f32 dinv vector instead of an O(N^2) wrapper pass.
    src, dst = edge_index[0], edge_index[1]
    adj = jnp.zeros((n, n), jnp.float32).at[dst, src].set(1.0)
    adj = adj + jnp.eye(n, dtype=jnp.float32)
    deg = jnp.sum(adj, axis=1)
    dinv = jnp.where(deg > 0, 1.0 / jnp.sqrt(deg), 0.0)
    x_scaled = x * dinv[:, None]                       # O(N*F), cheap

    # Pooling matrix in [B, N] layout (lane-dense column tiles), exact 0/1.
    one_hot = (batch[None, :] == jnp.arange(num_graphs)[:, None]).astype(jnp.float32)
    counts = jnp.sum(one_hot, axis=1, keepdims=True)
    inv_counts = 1.0 / jnp.maximum(counts, 1.0)        # (B, 1) f32

    # Padding to TPU-friendly shapes (exact: padded rows/cols are multiplied
    # by zero adjacency / pooling / weight entries before the real output).
    n_splits = 2 if n > tile_n else 1                  # two-core split of kernel 2
    n_p = _round_up(n, n_splits * tile_n)
    nt = n_p // tile_n
    npc = nt // n_splits
    f_p = _round_up(f_in, 128)
    h_p = _round_up(h, 128)
    b_p = _round_up(num_graphs, 8)
    td_p = _round_up(t_d, 128)

    a_p = _pad2(adj, n_p, n_p).astype(jnp.bfloat16)            # exact 0/1
    dinv_p = _pad2(dinv[:, None], n_p, 1)                      # f32
    xs_p = _pad2(x_scaled, n_p, f_p).astype(jnp.bfloat16)
    pool_p = _pad2(one_hot, b_p, n_p).astype(jnp.bfloat16)     # exact 0/1
    invc_p = _pad2(inv_counts, b_p, 1)                         # f32
    w1_p = _pad2(w1, f_p, h_p).astype(jnp.bfloat16)
    w2_p = _pad2(w2, h_p, h_p).astype(jnp.bfloat16)
    wp1_p = _pad2(wp1, h_p, h_p).astype(jnp.bfloat16)
    wp2_p = _pad2(wp2, h_p, td_p).astype(jnp.bfloat16)
    b1_p = _pad2(b1, 1, h_p)
    b2_p = _pad2(b2, 1, h_p)
    bp1_p = _pad2(bp1, 1, h_p)
    bp2_p = _pad2(bp2, 1, td_p)

    vmem_limit = _vmem_limit_bytes()
    contract_x_first = f_in <= h        # decided from TRUE dims, not padded

    # ---- GCN layer 1 -------------------------------------------------------
    if contract_x_first:
        h1s = pl.pallas_call(
            _gcn1_xfirst_kernel,
            out_shape=jax.ShapeDtypeStruct((n_p, h_p), jnp.bfloat16),
            grid=(nt,),
            in_specs=[
                pl.BlockSpec((tile_n, n_p), lambda i: (i, 0)),   # A row tile (streamed)
                _resident((n_p, f_p)),                           # dinv*X
                _resident((f_p, h_p)),                           # W1
                _resident((1, h_p)),                             # b1
                pl.BlockSpec((tile_n, 1), lambda i: (i, 0)),     # dinv tile
            ],
            out_specs=pl.BlockSpec((tile_n, h_p), lambda i: (i, 0)),
            compiler_params=pltpu.CompilerParams(
                dimension_semantics=("parallel",),
                vmem_limit_bytes=vmem_limit),
        )(a_p, xs_p, w1_p, b1_p, dinv_p)
    else:
        # Hoisted XW1 pass (computed once, not per adjacency tile).
        xw1 = pl.pallas_call(
            _xw1_kernel,
            out_shape=jax.ShapeDtypeStruct((n_p, h_p), jnp.bfloat16),
            grid=(nt,),
            in_specs=[
                pl.BlockSpec((tile_n, f_p), lambda i: (i, 0)),
                _resident((f_p, h_p)),
            ],
            out_specs=pl.BlockSpec((tile_n, h_p), lambda i: (i, 0)),
            compiler_params=pltpu.CompilerParams(
                dimension_semantics=("parallel",),
                vmem_limit_bytes=vmem_limit),
        )(xs_p, w1_p)
        h1s = pl.pallas_call(
            _gcn1_aw_kernel,
            out_shape=jax.ShapeDtypeStruct((n_p, h_p), jnp.bfloat16),
            grid=(nt,),
            in_specs=[
                pl.BlockSpec((tile_n, n_p), lambda i: (i, 0)),   # A row tile
                _resident((n_p, h_p)),                           # XW1
                _resident((1, h_p)),                             # b1
                pl.BlockSpec((tile_n, 1), lambda i: (i, 0)),     # dinv tile
            ],
            out_specs=pl.BlockSpec((tile_n, h_p), lambda i: (i, 0)),
            compiler_params=pltpu.CompilerParams(
                dimension_semantics=("parallel",),
                vmem_limit_bytes=vmem_limit),
        )(a_p, xw1, b1_p, dinv_p)

    # ---- GCN layer 2 + pooling partials (two-core capable) -----------------
    partials = pl.pallas_call(
        _gcn2_pool_kernel,
        out_shape=jax.ShapeDtypeStruct((n_splits, b_p, h_p), jnp.float32),
        grid=(n_splits, npc),
        in_specs=[
            pl.BlockSpec((tile_n, n_p), lambda c, j: (c * npc + j, 0)),   # A row tile
            _resident((n_p, h_p)),                                        # dinv*h1
            pl.BlockSpec((b_p, tile_n), lambda c, j: (0, c * npc + j)),   # pool col tile
            pl.BlockSpec((tile_n, 1), lambda c, j: (c * npc + j, 0)),     # dinv tile
            _resident((h_p, h_p)),                                        # W2
            _resident((1, h_p)),                                          # b2
        ],
        out_specs=pl.BlockSpec((1, b_p, h_p), lambda c, j: (c, 0, 0)),
        scratch_shapes=[pltpu.VMEM((b_p, h_p), jnp.float32)],
        compiler_params=pltpu.CompilerParams(
            dimension_semantics=("parallel", "arbitrary"),
            vmem_limit_bytes=vmem_limit),
    )(a_p, h1s, pool_p, dinv_p, w2_p, b2_p)

    # ---- reduce partials + mean + projector --------------------------------
    out = pl.pallas_call(
        _finalize_kernel,
        out_shape=jax.ShapeDtypeStruct((b_p, td_p), jnp.float32),
        grid=(1,),
        in_specs=[
            pl.BlockSpec((n_splits, b_p, h_p), lambda i: (0, 0, 0)),
            pl.BlockSpec((b_p, 1), lambda i: (0, 0)),
            pl.BlockSpec((h_p, h_p), lambda i: (0, 0)),
            pl.BlockSpec((1, h_p), lambda i: (0, 0)),
            pl.BlockSpec((h_p, td_p), lambda i: (0, 0)),
            pl.BlockSpec((1, td_p), lambda i: (0, 0)),
        ],
        out_specs=pl.BlockSpec((b_p, td_p), lambda i: (0, 0)),
        compiler_params=pltpu.CompilerParams(vmem_limit_bytes=vmem_limit),
    )(partials, invc_p, wp1_p, bp1_p, wp2_p, bp2_p)

    # Slice off padding; torch.nn.Unflatten(-1, (T, D_emb)).
    return out[:num_graphs, :t_d].reshape(num_graphs, mlp_out_tokens, embedding_dim)


# ----------------------------------------------------------------------------
# Pure-JAX f32 reference (module semantics) for correctness.
# ----------------------------------------------------------------------------
def reference_forward(x, edge_index, batch, params, *, num_graphs, mlp_out_tokens,
                      embedding_dim):
    n = x.shape[0]
    src, dst = edge_index[0], edge_index[1]
    adj = jnp.zeros((n, n), jnp.float32).at[dst, src].set(1.0) + jnp.eye(n)
    deg = jnp.sum(adj, axis=1)
    dinv = jnp.where(deg > 0, 1.0 / jnp.sqrt(deg), 0.0)
    a = adj * dinv[:, None] * dinv[None, :]
    (w1, b1, w2, b2, wp1, bp1, wp2, bp2) = params
    h1 = jnp.maximum((a @ x) @ w1 + b1, 0.0)
    h2 = (a @ h1) @ w2 + b2
    one_hot = (batch[None, :] == jnp.arange(num_graphs)[:, None]).astype(jnp.float32)
    pooled = (one_hot @ h2) / jnp.maximum(one_hot.sum(1, keepdims=True), 1.0)
    z = jax.nn.sigmoid(pooled @ wp1 + bp1)
    proj = z @ wp2 + bp2
    return proj.reshape(num_graphs, mlp_out_tokens, embedding_dim)


if __name__ == "__main__":
    key = jax.random.PRNGKey(0)

    def lin(kw, kb, fan_in, fan_out):
        bound = 1.0 / jnp.sqrt(jnp.float32(fan_in))
        w = jax.random.uniform(kw, (fan_in, fan_out), jnp.float32, -bound, bound)
        b = jax.random.uniform(kb, (1, fan_out), jnp.float32, -bound, bound)
        return w, b

    def run_case(k, N, F_IN, H, D_EMB, T, B, tile_n):
        ks = jax.random.split(k, 9)
        x = jax.random.normal(ks[0], (N, F_IN), jnp.float32)
        src = jnp.arange(N, dtype=jnp.int32)
        dst = (src + 1) % N
        edge_index = jnp.stack([jnp.concatenate([src, dst]),
                                jnp.concatenate([dst, src])], axis=0)
        batch = ((jnp.arange(N) * B) // N).astype(jnp.int32)

        w1, b1 = lin(ks[1], ks[2], F_IN, H)          # GNN layer 1
        w2, b2 = lin(ks[3], ks[4], H, H)             # GNN layer 2
        wp1, bp1 = lin(ks[5], ks[6], H, H)           # projector Linear(H, H)
        wp2, bp2 = lin(ks[7], ks[8], H, T * D_EMB)   # projector Linear(H, T*D)
        params = (w1, b1, w2, b2, wp1, bp1, wp2, bp2)

        out = g_retriever_forward(x, edge_index, batch, params,
                                  num_graphs=B, mlp_out_tokens=T,
                                  embedding_dim=D_EMB, tile_n=tile_n)
        out = jax.block_until_ready(out)
        ref = reference_forward(x, edge_index, batch, params,
                                num_graphs=B, mlp_out_tokens=T,
                                embedding_dim=D_EMB)
        assert out.shape == (B, T, D_EMB)
        err = float(jnp.max(jnp.abs(out - ref)))
        assert jnp.allclose(out, ref, atol=3e-2, rtol=3e-2), err

    k1, k2 = jax.random.split(key)
    # Case A: F_in <= H  -> contract (A @ Xs) first; multiple row tiles per
    # core slice exercise the pooled accumulator and the two-core split.
    run_case(k1, N=300, F_IN=20, H=40, D_EMB=64, T=2, B=3, tile_n=128)
    # Case B: F_in > H   -> XW1 hoisted into its own pass (kernel 0).
    run_case(k2, N=200, F_IN=80, H=48, D_EMB=32, T=3, B=2, tile_n=128)

    # TODO(synk): the LLM `_get_embeds` / causal-LM loss / generate and the
    # `use_lora` path have no clean Pallas equivalent; the projected
    # [B, T, D_EMB] prefix tokens produced above are what GRetriever hands
    # to the LLM.
    print("KERNEL_OK")
</pallas_src>

<mosaic_0001>
module attributes {stable_mosaic.version = 11 : i64} {
  func.func @_gcn1_xfirst_kernel(%arg0: i32, %arg1: memref<128x512xbf16, #tpu.memory_space<vmem>>, %arg2: memref<512x128xbf16, #tpu.memory_space<vmem>>, %arg3: memref<128x128xbf16, #tpu.memory_space<vmem>>, %arg4: memref<1x128xf32, #tpu.memory_space<vmem>>, %arg5: memref<128x1xf32, #tpu.memory_space<vmem>>, %arg6: memref<128x128xbf16, #tpu.memory_space<vmem>>) attributes {dimension_semantics = [#tpu.dimension_semantics<parallel>], iteration_bounds = array<i64: 4>, scalar_prefetch = 0 : i64, scratch_operands = 0 : i64, tpu.core_type = #tpu.core_type<tc>, window_params = [{transform_indices = @transform_0, window_bounds = array<i64: 128, 512>}, {pipeline_mode = #tpu.pipeline_mode<synchronous>, transform_indices = @transform_1, window_bounds = array<i64: 512, 128>}, {pipeline_mode = #tpu.pipeline_mode<synchronous>, transform_indices = @transform_2, window_bounds = array<i64: 128, 128>}, {pipeline_mode = #tpu.pipeline_mode<synchronous>, transform_indices = @transform_3, window_bounds = array<i64: 1, 128>}, {transform_indices = @transform_4, window_bounds = array<i64: 128, 1>}, {transform_indices = @transform_5, window_bounds = array<i64: 128, 128>}]} {
    %c0 = arith.constant 0 : index
    %c0_0 = arith.constant 0 : index
    %0 = vector.load %arg1[%c0, %c0_0] : memref<128x512xbf16, #tpu.memory_space<vmem>>, vector<128x512xbf16>
    %c0_1 = arith.constant 0 : index
    %c0_2 = arith.constant 0 : index
    %1 = vector.load %arg2[%c0_1, %c0_2] : memref<512x128xbf16, #tpu.memory_space<vmem>>, vector<512x128xbf16>
    %cst = arith.constant dense<0.000000e+00> : vector<128x128xf32>
    %2 = tpu.matmul %0, %1, %cst {dimension_numbers = #tpu.dot_dimension_numbers<[1], [0], [0], [1], [0, 0, 1, 1], [], []>} : vector<128x512xbf16>, vector<512x128xbf16>, vector<128x128xf32> -> vector<128x128xf32>
    %3 = arith.truncf %2 : vector<128x128xf32> to vector<128x128xbf16>
    %c0_3 = arith.constant 0 : index
    %c0_4 = arith.constant 0 : index
    %4 = vector.load %arg3[%c0_3, %c0_4] : memref<128x128xbf16, #tpu.memory_space<vmem>>, vector<128x128xbf16>
    %cst_5 = arith.constant dense<0.000000e+00> : vector<128x128xf32>
    %5 = tpu.matmul %3, %4, %cst_5 {dimension_numbers = #tpu.dot_dimension_numbers<[1], [0], [0], [1], [0, 0, 1, 1], [], []>} : vector<128x128xbf16>, vector<128x128xbf16>, vector<128x128xf32> -> vector<128x128xf32>
    %c0_6 = arith.constant 0 : index
    %c0_7 = arith.constant 0 : index
    %6 = vector.load %arg5[%c0_6, %c0_7] : memref<128x1xf32, #tpu.memory_space<vmem>>, vector<128x1xf32>
    %7 = vector.broadcast %6 : vector<128x1xf32> to vector<128x128xf32>
    %8 = arith.mulf %7, %5 : vector<128x128xf32>
    %c0_8 = arith.constant 0 : index
    %c0_9 = arith.constant 0 : index
    %9 = vector.load %arg4[%c0_8, %c0_9] : memref<1x128xf32, #tpu.memory_space<vmem>>, vector<1x128xf32>
    %10 = vector.broadcast %9 : vector<1x128xf32> to vector<128x128xf32>
    %11 = arith.addf %8, %10 : vector<128x128xf32>
    %cst_10 = arith.constant 0.000000e+00 : f32
    %12 = vector.broadcast %cst_10 : f32 to vector<128x128xf32>
    %13 = arith.maximumf %11, %12 : vector<128x128xf32>
    %14 = vector.broadcast %6 : vector<128x1xf32> to vector<128x128xf32>
    %15 = arith.mulf %14, %13 : vector<128x128xf32>
    %16 = arith.truncf %15 : vector<128x128xf32> to vector<128x128xbf16>
    %c0_11 = arith.constant 0 : index
    %c0_12 = arith.constant 0 : index
    %17 = vector.load %arg6[%c0_11, %c0_12] : memref<128x128xbf16, #tpu.memory_space<vmem>>, vector<128x128xbf16>
    tpu.vector_store %arg6[%c0_11, %c0_12], %16 {strides = array<i32>} : memref<128x128xbf16, #tpu.memory_space<vmem>>, vector<128x128xbf16>,
    return
  }
  func.func @transform_0(%arg0: i32) -> (i32, i32) {
    %c0_i32 = arith.constant 0 : i32
    %c0_i32_0 = arith.constant 0 : i32
    return %arg0, %c0_i32 : i32, i32
  }
  func.func @transform_1(%arg0: i32) -> (i32, i32) {
    %c0_i32 = arith.constant 0 : i32
    %c0_i32_0 = arith.constant 0 : i32
    %c0_i32_1 = arith.constant 0 : i32
    return %c0_i32, %c0_i32_0 : i32, i32
  }
  func.func @transform_2(%arg0: i32) -> (i32, i32) {
    %c0_i32 = arith.constant 0 : i32
    %c0_i32_0 = arith.constant 0 : i32
    %c0_i32_1 = arith.constant 0 : i32
    return %c0_i32, %c0_i32_0 : i32, i32
  }
  func.func @transform_3(%arg0: i32) -> (i32, i32) {
    %c0_i32 = arith.constant 0 : i32
    %c0_i32_0 = arith.constant 0 : i32
    %c0_i32_1 = arith.constant 0 : i32
    return %c0_i32, %c0_i32_0 : i32, i32
  }
  func.func @transform_4(%arg0: i32) -> (i32, i32) {
    %c0_i32 = arith.constant 0 : i32
    %c0_i32_0 = arith.constant 0 : i32
    return %arg0, %c0_i32 : i32, i32
  }
  func.func @transform_5(%arg0: i32) -> (i32, i32) {
    %c0_i32 = arith.constant 0 : i32
    %c0_i32_0 = arith.constant 0 : i32
    return %arg0, %c0_i32 : i32, i32
  }
}

</mosaic_0001>

<llo_original>
// kernel: tpu_custom_call.1
$region0: #{tpu_custom_call.1}
  #allocation0 [shape = 'u32[]', space=smem, size = 0x4, offset = 0x4, fixed_abs, tag = 'smem constant byte address 0x4 - core index']
  #allocation1 [shape = 'u32[144,128]{1,0:T(1,128)}', space=vmem, size = 0x12000, scoped, tag = 'internal scratch']
  %s0 = inlined_call_operand.hbm [shape: bf16[512,512], index: 0, kind: input, shape index: {}]
  %s1 = inlined_call_operand.vmem [shape: bf16[512,128], index: 1, kind: input, shape index: {}]
  %s2 = inlined_call_operand.vmem [shape: bf16[128,128], index: 2, kind: input, shape index: {}]
  %s3 = inlined_call_operand.vmem [shape: f32[1,128], index: 3, kind: input, shape index: {}]
  %s4 = inlined_call_operand.vmem [shape: f32[512,1], index: 4, kind: input, shape index: {}]
  %s5 = inlined_call_operand.hbm [shape: bf16[512,128], index: 5, kind: output, shape index: {}]
  %s6 = sld [smem:[#allocation0]]
  $region57: #{tpu_custom_call.1} parent=0
    _
  %s8 = ssub.s32 1, %s6
  %s9 = scalar_select 0, %s8, %s6
  $region1: #{tpu_custom_call.1} parent=0
    #allocation2 [shape = 'u8[262144]{0}', space=vmem, size = 0x40000, scoped, tag = 'input window, operand 0']
    #allocation3 [shape = 's32[2]{0}', space=sflag, size = 0x8, scoped, tag = 'scoped memory for tpu_custom_call.1']
    #allocation4 [shape = 's32[2]{0}', space=sflag, size = 0x8, scoped, tag = 'scoped memory for tpu_custom_call.1']
    #allocation5 [shape = 'u8[65536]{0}', space=vmem, size = 0x10000, scoped, tag = 'output window, operand 0']
    %10 = vsyncpa [#allocation3], 0
    %s11 = scalar_lea.sflag [#allocation3], 1
    %12 = vsyncpa %s11, 0
    %13 = vsyncpa [#allocation4], 0
    %s14 = scalar_lea.sflag [#allocation4], 1
    %15 = vsyncpa %s14, 0
    loop: start=0, step=1, limit=6
    $region2: #{tpu_custom_call.1} parent=1 // loop_pre_header
      _
    $region3: #{tpu_custom_call.1} parent=1 // loop_header
      %s17 = sphi 0, %s21
      %p18 = scmp.ge.s32.totalorder %s17, 6
      %s27 = sphi 0, %s29
      %s30 = sphi 0, %s27
      %s31 = sphi 0, %s30
      %s47 = sphi 0, %s31
      %s51 = sphi 0, %s51
      %s53 = sphi 0, %s51
      %s54 = sphi 0, %s53
      %s68 = sphi 0, %s54
      %s72 = sphi 0, %s72
      %s74 = sphi 0, %s72
      %s75 = sphi 0, %s74
      %s89 = sphi 0, %s75
      %s93 = sphi 0, %s93
      %s95 = sphi 0, %s93
      %s96 = sphi 0, %s95
      %s110 = sphi 0, %s96
      %s116 = sphi 0, %s118
      %s119 = sphi 0, %s116
      %s120 = sphi 0, %s119
      %s136 = sphi 0, %s120
      %s142 = sphi 0, %s144
      %s145 = sphi 0, %s142
      %s146 = sphi 0, %s145
      %s162 = sphi 0, %s146
    $region4: #{tpu_custom_call.1} parent=1 // loop_header_branch
      %20 = sbr.rel (%p18) target = $region8
    $region5: #{tpu_custom_call.1} parent=1 // loop_body
      %s22 = ssub.s32 %s17, 1
      %s23 = ssub.s32 %s17, 2
      %s24 = sadd.s32 %s17, 1
      %s25 = ssub.s32 %s17, %s24
      %p26 = scmp.eq.s32.totalorder %s25, 0
      %s28 = sadd.s32 %s27, 1
      %s29 = scalar_select %p26, %s27, %s28
      %p32 = pneg %p26
      %p33 = scmp.eq.s32.totalorder %s17, 3
      %p34 = por %p32, %p33
      %p35 = scmp.ne.s32.totalorder %s27, %s30
      %p36 = scmp.eq.s32.totalorder %s17, 0
      %p37 = por %p35, %p36
      %p38 = scmp.ne.s32.totalorder %s27, %s30
      %p39 = scmp.eq.s32.totalorder %s22, 3
      %p40 = por %p38, %p39
      %p41 = scmp.ne.s32.totalorder %s30, %s31
      %p42 = scmp.eq.s32.totalorder %s22, 0
      %p43 = por %p41, %p42
      %p44 = scmp.ne.s32.totalorder %s30, %s31
      %p45 = scmp.eq.s32.totalorder %s23, 3
      %p46 = por %p44, %p45
      %p48 = scmp.ne.s32.totalorder %s31, %s47
      %p49 = scmp.eq.s32.totalorder %s23, 0
      %p50 = por %p48, %p49
      %s52 = sadd.s32 %s51, 1
      %p55 = scmp.eq.s32.totalorder %s17, 3
      %p56 = scmp.ne.s32.totalorder %s51, %s53
      %p57 = scmp.eq.s32.totalorder %s17, 0
      %p58 = por %p56, %p57
      %p59 = scmp.ne.s32.totalorder %s51, %s53
      %p60 = scmp.eq.s32.totalorder %s22, 3
      %p61 = por %p59, %p60
      %p62 = scmp.ne.s32.totalorder %s53, %s54
      %p63 = scmp.eq.s32.totalorder %s22, 0
      %p64 = por %p62, %p63
      %p65 = scmp.ne.s32.totalorder %s53, %s54
      %p66 = scmp.eq.s32.totalorder %s23, 3
      %p67 = por %p65, %p66
      %p69 = scmp.ne.s32.totalorder %s54, %s68
      %p70 = scmp.eq.s32.totalorder %s23, 0
      %p71 = por %p69, %p70
      %s73 = sadd.s32 %s72, 1
      %p76 = scmp.eq.s32.totalorder %s17, 3
      %p77 = scmp.ne.s32.totalorder %s72, %s74
      %p78 = scmp.eq.s32.totalorder %s17, 0
      %p79 = por %p77, %p78
      %p80 = scmp.ne.s32.totalorder %s72, %s74
      %p81 = scmp.eq.s32.totalorder %s22, 3
      %p82 = por %p80, %p81
      %p83 = scmp.ne.s32.totalorder %s74, %s75
      %p84 = scmp.eq.s32.totalorder %s22, 0
      %p85 = por %p83, %p84
      %p86 = scmp.ne.s32.totalorder %s74, %s75
      %p87 = scmp.eq.s32.totalorder %s23, 3
      %p88 = por %p86, %p87
      %p90 = scmp.ne.s32.totalorder %s75, %s89
      %p91 = scmp.eq.s32.totalorder %s23, 0
      %p92 = por %p90, %p91
      %s94 = sadd.s32 %s93, 1
      %p97 = scmp.eq.s32.totalorder %s17, 3
      %p98 = scmp.ne.s32.totalorder %s93, %s95
      %p99 = scmp.eq.s32.totalorder %s17, 0
      %p100 = por %p98, %p99
      %p101 = scmp.ne.s32.totalorder %s93, %s95
      %p102 = scmp.eq.s32.totalorder %s22, 3
      %p103 = por %p101, %p102
      %p104 = scmp.ne.s32.totalorder %s95, %s96
      %p105 = scmp.eq.s32.totalorder %s22, 0
      %p106 = por %p104, %p105
      %p107 = scmp.ne.s32.totalorder %s95, %s96
      %p108 = scmp.eq.s32.totalorder %s23, 3
      %p109 = por %p107, %p108
      %p111 = scmp.ne.s32.totalorder %s96, %s110
      %p112 = scmp.eq.s32.totalorder %s23, 0
      %p113 = por %p111, %p112
      %s114 = ssub.s32 %s17, %s24
      %p115 = scmp.eq.s32.totalorder %s114, 0
      %s117 = sadd.s32 %s116, 1
      %s118 = scalar_select %p115, %s116, %s117
      %p121 = pneg %p115
      %p122 = scmp.eq.s32.totalorder %s17, 3
      %p123 = por %p121, %p122
      %p124 = scmp.ne.s32.totalorder %s116, %s119
      %p125 = scmp.eq.s32.totalorder %s17, 0
      %p126 = por %p124, %p125
      %p127 = scmp.ne.s32.totalorder %s116, %s119
      %p128 = scmp.eq.s32.totalorder %s22, 3
      %p129 = por %p127, %p128
      %p130 = scmp.ne.s32.totalorder %s119, %s120
      %p131 = scmp.eq.s32.totalorder %s22, 0
      %p132 = por %p130, %p131
      %p133 = scmp.ne.s32.totalorder %s119, %s120
      %p134 = scmp.eq.s32.totalorder %s23, 3
      %p135 = por %p133, %p134
      %p137 = scmp.ne.s32.totalorder %s120, %s136
      %p138 = scmp.eq.s32.totalorder %s23, 0
      %p139 = por %p137, %p138
      %s140 = ssub.s32 %s17, %s24
      %p141 = scmp.eq.s32.totalorder %s140, 0
      %s143 = sadd.s32 %s142, 1
      %s144 = scalar_select %p141, %s142, %s143
      %p147 = pneg %p141
      %p148 = scmp.eq.s32.totalorder %s17, 3
      %p149 = por %p147, %p148
      %p150 = scmp.ne.s32.totalorder %s142, %s145
      %p151 = scmp.eq.s32.totalorder %s17, 0
      %p152 = por %p150, %p151
      %p153 = scmp.ne.s32.totalorder %s142, %s145
      %p154 = scmp.eq.s32.totalorder %s22, 3
      %p155 = por %p153, %p154
      %p156 = scmp.ne.s32.totalorder %s145, %s146
      %p157 = scmp.eq.s32.totalorder %s22, 0
      %p158 = por %p156, %p157
      %p159 = scmp.ne.s32.totalorder %s145, %s146
      %p160 = scmp.eq.s32.totalorder %s23, 3
      %p161 = por %p159, %p160
      %p163 = scmp.ne.s32.totalorder %s146, %s162
      %p164 = scmp.eq.s32.totalorder %s23, 0
      %p165 = por %p163, %p164
      %p166 = scmp.le.s32.totalorder 1, %s17
      %p167 = scmp.lt.s32.totalorder %s17, 5
      %p168 = pnand %p166, %p167
      %p169 = pneg %p168
      // Predicated region
      $region9: #{tpu_custom_call.1} parent=5 // pred_check
        _
      $region10: #{tpu_custom_call.1} parent=5 // pred_check_branch
        %171 = sbr.rel (%p168) target = $region12
      $region11: #{tpu_custom_call.1} parent=5 // pred_region
        %s172 = ssub.s32 %s17, 1
        // Predicated region
        $region13: #{tpu_custom_call.1} parent=11 // pred_check
          %p173 = pneg %p64
        $region14: #{tpu_custom_call.1} parent=11 // pred_check_branch
          %175 = sbr.rel (%p173) target = $region16
        $region15: #{tpu_custom_call.1} parent=11 // pred_region
          _
        $region16: #{tpu_custom_call.1} parent=11 // pred_fallthru
          _
        // Predicated region
        $region17: #{tpu_custom_call.1} parent=11 // pred_check
          %p176 = pneg %p85
        $region18: #{tpu_custom_call.1} parent=11 // pred_check_branch
          %178 = sbr.rel (%p176) target = $region20
        $region19: #{tpu_custom_call.1} parent=11 // pred_region
          _
        $region20: #{tpu_custom_call.1} parent=11 // pred_fallthru
          _
        // Predicated region
        $region21: #{tpu_custom_call.1} parent=11 // pred_check
          %p179 = pneg %p106
        $region22: #{tpu_custom_call.1} parent=11 // pred_check_branch
          %181 = sbr.rel (%p179) target = $region24
        $region23: #{tpu_custom_call.1} parent=11 // pred_region
          _
        $region24: #{tpu_custom_call.1} parent=11 // pred_fallthru
          _
      $region12: #{tpu_custom_call.1} parent=5 // pred_fallthru
        _
      %p182 = scmp.lt.s32.totalorder %s17, 4
      // Predicated region
      $region25: #{tpu_custom_call.1} parent=5 // pred_check
        %p183 = pneg %p182
      $region26: #{tpu_custom_call.1} parent=5 // pred_check_branch
        %185 = sbr.rel (%p183) target = $region28
      $region27: #{tpu_custom_call.1} parent=5 // pred_region
        // Predicated region
        $region29: #{tpu_custom_call.1} parent=27 // pred_check
          %p186 = pneg %p37
        $region30: #{tpu_custom_call.1} parent=27 // pred_check_branch
          %188 = sbr.rel (%p186) target = $region32
        $region31: #{tpu_custom_call.1} parent=27 // pred_region
          %s189 = sand.u32 %s27, 1
          %s190 = scalar_lea.sflag [#allocation3], %s189
          %s191 = sand.u32 %s27, 1
          %s192 = smul.addr %s191, 256
          %s193 = scalar_lea.vmem [#allocation2], %s192
          %s194 = smul.u32 16, %s17
          %s196 = ssub.s32 4096, 4096
          %197 = vsyncadd %s190, %s196
          %s198 = smul.addr %s194, 4
          %s199 = smul.addr %s198, 64
          %s200 = scalar_lea.hbm %s0, %s199
          %s201 = sshll.u32 %s193, 4
          %s202 = int_to_ptr.vmem [resolvable:$true] %s201
          %207 = dma.hbm_to_vmem [thread:$0]  %s200, 4096, %s202, %s190, 256, 256, 16
        $region32: #{tpu_custom_call.1} parent=27 // pred_fallthru
          _
        // Predicated region
        $region33: #{tpu_custom_call.1} parent=27 // pred_check
          %p208 = pneg %p126
        $region34: #{tpu_custom_call.1} parent=27 // pred_check_branch
          %210 = sbr.rel (%p208) target = $region36
        $region35: #{tpu_custom_call.1} parent=27 // pred_region
          %s211 = smul.u32 16, %s17
          %p212 = scmp.lt.s32.totalorder %s211, 63
          %s213 = scalar_select %p212, %s211, 63
          %s214 = smul.addr %s213, 8
          %s215 = scalar_lea.vmem %s4, %s214
          %s216 = smul.u32 16, %s17
        $region36: #{tpu_custom_call.1} parent=27 // pred_fallthru
          _
      $region28: #{tpu_custom_call.1} parent=5 // pred_fallthru
        _
      %p217 = scmp.le.s32.totalorder 1, %s17
      %p218 = scmp.lt.s32.totalorder %s17, 5
      %p219 = pnand %p217, %p218
      %p220 = pneg %p219
      // Predicated region
      $region37: #{tpu_custom_call.1} parent=5 // pred_check
        _
      $region38: #{tpu_custom_call.1} parent=5 // pred_check_branch
        %222 = sbr.rel (%p219) target = $region40
      $region39: #{tpu_custom_call.1} parent=5 // pred_region
        %s223 = ssub.s32 %s17, 1
        %s224 = sand.u32 %s30, 1
        %s225 = scalar_lea.sflag [#allocation3], %s224
        %s226 = sand.u32 %s30, 1
        %s227 = smul.addr %s226, 256
        %s228 = scalar_lea.vmem [#allocation2], %s227
        // Predicated region
        $region41: #{tpu_custom_call.1} parent=39 // pred_check
          %p229 = pneg %p43
        $region42: #{tpu_custom_call.1} parent=39 // pred_check_branch
          %231 = sbr.rel (%p229) target = $region44
        $region43: #{tpu_custom_call.1} parent=39 // pred_region
          %232 = dma.done %s225, 4096
        $region44: #{tpu_custom_call.1} parent=39 // pred_fallthru
          _
        %s233 = sand.u32 %s30, 1
        %s234 = scalar_lea.sflag [#allocation3], %s233
        %s235 = sand.u32 %s30, 1
        %s236 = smul.addr %s235, 256
        %s237 = scalar_lea.vmem [#allocation2], %s236
        %p238 = pneg %p43
        %p239 = pneg %p40
        %p240 = pneg %p64
        %p241 = pneg %p61
        %p242 = pneg %p85
        %p243 = pneg %p82
        %p244 = pneg %p106
        %p245 = pneg %p103
        %s246 = smul.u32 16, %s22
        %p247 = scmp.lt.s32.totalorder %s246, 63
        %s248 = scalar_select %p247, %s246, 63
        %s249 = smul.addr %s248, 8
        %s250 = scalar_lea.vmem %s4, %s249
        %p251 = pneg %p132
        %p252 = pneg %p129
        %p253 = pneg %p158
        %p254 = pneg %p155
        %s255 = sand.u32 %s145, 1
        %s256 = scalar_lea.sflag [#allocation4], %s255
        %s257 = sand.u32 %s145, 1
        %s258 = smul.addr %s257, 64
        %s259 = scalar_lea.vmem [#allocation5], %s258
        %s260 = smul.u32 16, %s22
        %s261 = smul.u32 16, %s22
        %p262 = scmp.lt.s32.totalorder %s261, 63
        %s263 = scalar_select %p262, %s261, 63
        %s264 = smul.addr %s263, 8
        %s265 = scalar_lea.vmem %s4, %s264
        %s266 = smul.u32 16, %s22
        %s267 = smul.u32 16, %s22
        %v269 = vld [vmem:[%s228] sm:$0xff]
        %v270 = vld [vmem:[%s228 + $0x8] sm:$0xff]
        %v271 = vld [vmem:[%s228 + $0x10] sm:$0xff]
        %v272 = vld [vmem:[%s228 + $0x18] sm:$0xff]
        %v273 = vld [vmem:[%s228 + $0x20] sm:$0xff]
        %v274 = vld [vmem:[%s228 + $0x28] sm:$0xff]
        %v275 = vld [vmem:[%s228 + $0x30] sm:$0xff]
        %v276 = vld [vmem:[%s228 + $0x38] sm:$0xff]
        %v277 = vld [vmem:[%s228 + $0x40] sm:$0xff]
        %v278 = vld [vmem:[%s228 + $0x48] sm:$0xff]
        %v279 = vld [vmem:[%s228 + $0x50] sm:$0xff]
        %v280 = vld [vmem:[%s228 + $0x58] sm:$0xff]
        %v281 = vld [vmem:[%s228 + $0x60] sm:$0xff]
        %v282 = vld [vmem:[%s228 + $0x68] sm:$0xff]
        %v283 = vld [vmem:[%s228 + $0x70] sm:$0xff]
        %v284 = vld [vmem:[%s228 + $0x78] sm:$0xff]
        %v285 = vld [vmem:[%s228 + $0x80] sm:$0xff]
        %v286 = vld [vmem:[%s228 + $0x88] sm:$0xff]
        %v287 = vld [vmem:[%s228 + $0x90] sm:$0xff]
        %v288 = vld [vmem:[%s228 + $0x98] sm:$0xff]
        %v289 = vld [vmem:[%s228 + $0xa0] sm:$0xff]
        %v290 = vld [vmem:[%s228 + $0xa8] sm:$0xff]
        %v291 = vld [vmem:[%s228 + $0xb0] sm:$0xff]
        %v292 = vld [vmem:[%s228 + $0xb8] sm:$0xff]
        %v293 = vld [vmem:[%s228 + $0xc0] sm:$0xff]
        %v294 = vld [vmem:[%s228 + $0xc8] sm:$0xff]
        %v295 = vld [vmem:[%s228 + $0xd0] sm:$0xff]
        %v296 = vld [vmem:[%s228 + $0xd8] sm:$0xff]
        %v297 = vld [vmem:[%s228 + $0xe0] sm:$0xff]
        %v298 = vld [vmem:[%s228 + $0xe8] sm:$0xff]
        %v299 = vld [vmem:[%s228 + $0xf0] sm:$0xff]
        %v300 = vld [vmem:[%s228 + $0xf8] sm:$0xff]
        %v301 = vld [vmem:[%s1] sm:$0xf]
        %v302 = vld [vmem:[%s1 + $0x4] sm:$0xf]
        %v303 = vld [vmem:[%s1 + $0x8] sm:$0xf]
        %v304 = vld [vmem:[%s1 + $0xc] sm:$0xf]
        %v305 = vld [vmem:[%s1 + $0x10] sm:$0xf]
        %v306 = vld [vmem:[%s1 + $0x14] sm:$0xf]
        %v307 = vld [vmem:[%s1 + $0x18] sm:$0xf]
        %v308 = vld [vmem:[%s1 + $0x1c] sm:$0xf]
        %v309 = vld [vmem:[%s1 + $0x20] sm:$0xf]
        %v310 = vld [vmem:[%s1 + $0x24] sm:$0xf]
        %v311 = vld [vmem:[%s1 + $0x28] sm:$0xf]
        %v312 = vld [vmem:[%s1 + $0x2c] sm:$0xf]
        %v313 = vld [vmem:[%s1 + $0x30] sm:$0xf]
        %v314 = vld [vmem:[%s1 + $0x34] sm:$0xf]
        %v315 = vld [vmem:[%s1 + $0x38] sm:$0xf]
        %v316 = vld [vmem:[%s1 + $0x3c] sm:$0xf]
        %v317 = vld [vmem:[%s1 + $0x40] sm:$0xf]
        %v318 = vld [vmem:[%s1 + $0x44] sm:$0xf]
        %v319 = vld [vmem:[%s1 + $0x48] sm:$0xf]
        %v320 = vld [vmem:[%s1 + $0x4c] sm:$0xf]
        %v321 = vld [vmem:[%s1 + $0x50] sm:$0xf]
        %v322 = vld [vmem:[%s1 + $0x54] sm:$0xf]
        %v323 = vld [vmem:[%s1 + $0x58] sm:$0xf]
        %v324 = vld [vmem:[%s1 + $0x5c] sm:$0xf]
        %v325 = vld [vmem:[%s1 + $0x60] sm:$0xf]
        %v326 = vld [vmem:[%s1 + $0x64] sm:$0xf]
        %v327 = vld [vmem:[%s1 + $0x68] sm:$0xf]
        %v328 = vld [vmem:[%s1 + $0x6c] sm:$0xf]
        %v329 = vld [vmem:[%s1 + $0x70] sm:$0xf]
        %v330 = vld [vmem:[%s1 + $0x74] sm:$0xf]
        %v331 = vld [vmem:[%s1 + $0x78] sm:$0xf]
        %v332 = vld [vmem:[%s1 + $0x7c] sm:$0xf]
        %v333 = vld [vmem:[%s1 + $0x80] sm:$0xf]
        %v334 = vld [vmem:[%s1 + $0x84] sm:$0xf]
        %v335 = vld [vmem:[%s1 + $0x88] sm:$0xf]
        %v336 = vld [vmem:[%s1 + $0x8c] sm:$0xf]
        %v337 = vld [vmem:[%s1 + $0x90] sm:$0xf]
        %v338 = vld [vmem:[%s1 + $0x94] sm:$0xf]
        %v339 = vld [vmem:[%s1 + $0x98] sm:$0xf]
        %v340 = vld [vmem:[%s1 + $0x9c] sm:$0xf]
        %v341 = vld [vmem:[%s1 + $0xa0] sm:$0xf]
        %v342 = vld [vmem:[%s1 + $0xa4] sm:$0xf]
        %v343 = vld [vmem:[%s1 + $0xa8] sm:$0xf]
        %v344 = vld [vmem:[%s1 + $0xac] sm:$0xf]
        %v345 = vld [vmem:[%s1 + $0xb0] sm:$0xf]
        %v346 = vld [vmem:[%s1 + $0xb4] sm:$0xf]
        %v347 = vld [vmem:[%s1 + $0xb8] sm:$0xf]
        %v348 = vld [vmem:[%s1 + $0xbc] sm:$0xf]
        %v349 = vld [vmem:[%s1 + $0xc0] sm:$0xf]
        %v350 = vld [vmem:[%s1 + $0xc4] sm:$0xf]
        %v351 = vld [vmem:[%s1 + $0xc8] sm:$0xf]
        %v352 = vld [vmem:[%s1 + $0xcc] sm:$0xf]
        %v353 = vld [vmem:[%s1 + $0xd0] sm:$0xf]
        %v354 = vld [vmem:[%s1 + $0xd4] sm:$0xf]
        %v355 = vld [vmem:[%s1 + $0xd8] sm:$0xf]
        %v356 = vld [vmem:[%s1 + $0xdc] sm:$0xf]
        %v357 = vld [vmem:[%s1 + $0xe0] sm:$0xf]
        %v358 = vld [vmem:[%s1 + $0xe4] sm:$0xf]
        %v359 = vld [vmem:[%s1 + $0xe8] sm:$0xf]
        %v360 = vld [vmem:[%s1 + $0xec] sm:$0xf]
        %v361 = vld [vmem:[%s1 + $0xf0] sm:$0xf]
        %v362 = vld [vmem:[%s1 + $0xf4] sm:$0xf]
        %v363 = vld [vmem:[%s1 + $0xf8] sm:$0xf]
        %v364 = vld [vmem:[%s1 + $0xfc] sm:$0xf]
        %v397 = vunpack.c.l.b16 %v269
        %v398 = vunpack.c.h.b16 %v269
        %v399 = vunpack.c.l.b16 %v270
        %v400 = vunpack.c.h.b16 %v270
        %v401 = vunpack.c.l.b16 %v271
        %v402 = vunpack.c.h.b16 %v271
        %v403 = vunpack.c.l.b16 %v272
        %v404 = vunpack.c.h.b16 %v272
        %v405 = vunpack.c.l.b16 %v273
        %v406 = vunpack.c.h.b16 %v273
        %v407 = vunpack.c.l.b16 %v274
        %v408 = vunpack.c.h.b16 %v274
        %v409 = vunpack.c.l.b16 %v275
        %v410 = vunpack.c.h.b16 %v275
        %v411 = vunpack.c.l.b16 %v276
        %v412 = vunpack.c.h.b16 %v276
        %v413 = vunpack.c.l.b16 %v277
        %v414 = vunpack.c.h.b16 %v277
        %v415 = vunpack.c.l.b16 %v278
        %v416 = vunpack.c.h.b16 %v278
        %v417 = vunpack.c.l.b16 %v279
        %v418 = vunpack.c.h.b16 %v279
        %v419 = vunpack.c.l.b16 %v280
        %v420 = vunpack.c.h.b16 %v280
        %v421 = vunpack.c.l.b16 %v281
        %v422 = vunpack.c.h.b16 %v281
        %v423 = vunpack.c.l.b16 %v282
        %v424 = vunpack.c.h.b16 %v282
        %v425 = vunpack.c.l.b16 %v283
        %v426 = vunpack.c.h.b16 %v283
        %v427 = vunpack.c.l.b16 %v284
        %v428 = vunpack.c.h.b16 %v284
        %v429 = vunpack.c.l.b16 %v285
        %v430 = vunpack.c.h.b16 %v285
        %v431 = vunpack.c.l.b16 %v286
        %v432 = vunpack.c.h.b16 %v286
        %v433 = vunpack.c.l.b16 %v287
        %v434 = vunpack.c.h.b16 %v287
        %v435 = vunpack.c.l.b16 %v288
        %v436 = vunpack.c.h.b16 %v288
        %v437 = vunpack.c.l.b16 %v289
        %v438 = vunpack.c.h.b16 %v289
        %v439 = vunpack.c.l.b16 %v290
        %v440 = vunpack.c.h.b16 %v290
        %v441 = vunpack.c.l.b16 %v291
        %v442 = vunpack.c.h.b16 %v291
        %v443 = vunpack.c.l.b16 %v292
        %v444 = vunpack.c.h.b16 %v292
        %v445 = vunpack.c.l.b16 %v293
        %v446 = vunpack.c.h.b16 %v293
        %v447 = vunpack.c.l.b16 %v294
        %v448 = vunpack.c.h.b16 %v294
        %v449 = vunpack.c.l.b16 %v295
        %v450 = vunpack.c.h.b16 %v295
        %v451 = vunpack.c.l.b16 %v296
        %v452 = vunpack.c.h.b16 %v296
        %v453 = vunpack.c.l.b16 %v297
        %v454 = vunpack.c.h.b16 %v297
        %v455 = vunpack.c.l.b16 %v298
        %v456 = vunpack.c.h.b16 %v298
        %v457 = vunpack.c.l.b16 %v299
        %v458 = vunpack.c.h.b16 %v299
        %v459 = vunpack.c.l.b16 %v300
        %v460 = vunpack.c.h.b16 %v300
        %v461 = vpack.c.b16 %v401, %v397
        %v462 = vpack.c.b16 %v402, %v398
        %v463 = vpack.c.b16 %v403, %v399
        %v464 = vpack.c.b16 %v404, %v400
        %v465 = vpack.c.b16 %v409, %v405
        %v466 = vpack.c.b16 %v410, %v406
        %v467 = vpack.c.b16 %v411, %v407
        %v468 = vpack.c.b16 %v412, %v408
        %v469 = vpack.c.b16 %v417, %v413
        %v470 = vpack.c.b16 %v418, %v414
        %v471 = vpack.c.b16 %v419, %v415
        %v472 = vpack.c.b16 %v420, %v416
        %v473 = vpack.c.b16 %v425, %v421
        %v474 = vpack.c.b16 %v426, %v422
        %v475 = vpack.c.b16 %v427, %v423
        %v476 = vpack.c.b16 %v428, %v424
        %v477 = vpack.c.b16 %v433, %v429
        %v478 = vpack.c.b16 %v434, %v430
        %v479 = vpack.c.b16 %v435, %v431
        %v480 = vpack.c.b16 %v436, %v432
        %v481 = vpack.c.b16 %v441, %v437
        %v482 = vpack.c.b16 %v442, %v438
        %v483 = vpack.c.b16 %v443, %v439
        %v484 = vpack.c.b16 %v444, %v440
        %v485 = vpack.c.b16 %v449, %v445
        %v486 = vpack.c.b16 %v450, %v446
        %v487 = vpack.c.b16 %v451, %v447
        %v488 = vpack.c.b16 %v452, %v448
        %v489 = vpack.c.b16 %v457, %v453
        %v490 = vpack.c.b16 %v458, %v454
        %v491 = vpack.c.b16 %v459, %v455
        %v492 = vpack.c.b16 %v460, %v456
        %v589 = vunpack.c.l.b16 %v301
        %v590 = vunpack.c.l.b16 %v302
        %v591 = vunpack.c.l.b16 %v303
        %v592 = vunpack.c.l.b16 %v304
        %v593 = vunpack.c.l.b16 %v305
        %v594 = vunpack.c.l.b16 %v306
        %v595 = vunpack.c.l.b16 %v307
        %v596 = vunpack.c.l.b16 %v308
        %v597 = vunpack.c.l.b16 %v309
        %v598 = vunpack.c.l.b16 %v310
        %v599 = vunpack.c.l.b16 %v311
        %v600 = vunpack.c.l.b16 %v312
        %v601 = vunpack.c.l.b16 %v313
        %v602 = vunpack.c.l.b16 %v314
        %v603 = vunpack.c.l.b16 %v315
        %v604 = vunpack.c.l.b16 %v316
        %v605 = vunpack.c.l.b16 %v317
        %v606 = vunpack.c.l.b16 %v318
        %v607 = vunpack.c.l.b16 %v319
        %v608 = vunpack.c.l.b16 %v320
        %v609 = vunpack.c.l.b16 %v321
        %v610 = vunpack.c.l.b16 %v322
        %v611 = vunpack.c.l.b16 %v323
        %v612 = vunpack.c.l.b16 %v324
        %v613 = vunpack.c.l.b16 %v325
        %v614 = vunpack.c.l.b16 %v326
        %v615 = vunpack.c.l.b16 %v327
        %v616 = vunpack.c.l.b16 %v328
        %v617 = vunpack.c.l.b16 %v329
        %v618 = vunpack.c.l.b16 %v330
        %v619 = vunpack.c.l.b16 %v331
        %v620 = vunpack.c.l.b16 %v332
        %v621 = vunpack.c.l.b16 %v333
        %v622 = vunpack.c.l.b16 %v334
        %v623 = vunpack.c.l.b16 %v335
        %v624 = vunpack.c.l.b16 %v336
        %v625 = vunpack.c.l.b16 %v337
        %v626 = vunpack.c.l.b16 %v338
        %v627 = vunpack.c.l.b16 %v339
        %v628 = vunpack.c.l.b16 %v340
        %v629 = vunpack.c.l.b16 %v341
        %v630 = vunpack.c.l.b16 %v342
        %v631 = vunpack.c.l.b16 %v343
        %v632 = vunpack.c.l.b16 %v344
        %v633 = vunpack.c.l.b16 %v345
        %v634 = vunpack.c.l.b16 %v346
        %v635 = vunpack.c.l.b16 %v347
        %v636 = vunpack.c.l.b16 %v348
        %v637 = vunpack.c.l.b16 %v349
        %v638 = vunpack.c.l.b16 %v350
        %v639 = vunpack.c.l.b16 %v351
        %v640 = vunpack.c.l.b16 %v352
        %v641 = vunpack.c.l.b16 %v353
        %v642 = vunpack.c.l.b16 %v354
        %v643 = vunpack.c.l.b16 %v355
        %v644 = vunpack.c.l.b16 %v356
        %v645 = vunpack.c.l.b16 %v357
        %v646 = vunpack.c.l.b16 %v358
        %v647 = vunpack.c.l.b16 %v359
        %v648 = vunpack.c.l.b16 %v360
        %v649 = vunpack.c.l.b16 %v361
        %v650 = vunpack.c.l.b16 %v362
        %v651 = vunpack.c.l.b16 %v363
        %v652 = vunpack.c.l.b16 %v364
        %v653 = vpack.c.b16 %v590, %v589
        %v654 = vpack.c.b16 %v592, %v591
        %v655 = vpack.c.b16 %v594, %v593
        %v656 = vpack.c.b16 %v596, %v595
        %v657 = vpack.c.b16 %v598, %v597
        %v658 = vpack.c.b16 %v600, %v599
        %v659 = vpack.c.b16 %v602, %v601
        %v660 = vpack.c.b16 %v604, %v603
        %v661 = vpack.c.b16 %v606, %v605
        %v662 = vpack.c.b16 %v608, %v607
        %v663 = vpack.c.b16 %v610, %v609
        %v664 = vpack.c.b16 %v612, %v611
        %v665 = vpack.c.b16 %v614, %v613
        %v666 = vpack.c.b16 %v616, %v615
        %v667 = vpack.c.b16 %v618, %v617
        %v668 = vpack.c.b16 %v620, %v619
        %v669 = vpack.c.b16 %v622, %v621
        %v670 = vpack.c.b16 %v624, %v623
        %v671 = vpack.c.b16 %v626, %v625
        %v672 = vpack.c.b16 %v628, %v627
        %v673 = vpack.c.b16 %v630, %v629
        %v674 = vpack.c.b16 %v632, %v631
        %v675 = vpack.c.b16 %v634, %v633
        %v676 = vpack.c.b16 %v636, %v635
        %v677 = vpack.c.b16 %v638, %v637
        %v678 = vpack.c.b16 %v640, %v639
        %v679 = vpack.c.b16 %v642, %v641
        %v680 = vpack.c.b16 %v644, %v643
        %v681 = vpack.c.b16 %v646, %v645
        %v682 = vpack.c.b16 %v648, %v647
        %v683 = vpack.c.b16 %v650, %v649
        %v684 = vpack.c.b16 %v652, %v651
        %717 = vmatprep.subr.bf16.mxu0 0
        %718 = vmatpush1.bf16.msra.mxu0 %v660
        %719 = vmatprep.subr.bf16.mxu0 0
        %720 = vmatpush1.bf16.msra.mxu0 %v659
        %721 = vmatprep.subr.bf16.mxu0 0
        %722 = vmatpush1.bf16.msra.mxu0 %v658
        %723 = vmatprep.subr.bf16.mxu0 0
        %724 = vmatpush1.bf16.msra.mxu0 %v657
        %725 = vmatprep.subr.bf16.mxu0 0
        %726 = vmatpush1.bf16.msra.mxu0 %v656
        %727 = vmatprep.subr.bf16.mxu0 0
        %728 = vmatpush1.bf16.msra.mxu0 %v655
        %729 = vmatprep.subr.bf16.mxu0 0
        %730 = vmatpush1.bf16.msra.mxu0 %v654
        %731 = vmatprep.subr.bf16.mxu0 0
        %732 = vmatpush1.bf16.msra.mxu0 %v653
        %733 = vmatprep.subr.bf16.mxu0 0
        %734 = vmatpush2.bf16.msra.mxu0 %v668
        %735 = vmatprep.subr.bf16.mxu0 0
        %736 = vmatpush2.bf16.msra.mxu0 %v667
        %737 = vmatprep.subr.bf16.mxu0 0
        %738 = vmatpush2.bf16.msra.mxu0 %v666
        %739 = vmatprep.subr.bf16.mxu0 0
        %740 = vmatpush2.bf16.msra.mxu0 %v665
        %741 = vmatprep.subr.bf16.mxu0 0
        %742 = vmatpush2.bf16.msra.mxu0 %v664
        %743 = vmatprep.subr.bf16.mxu0 0
        %744 = vmatpush2.bf16.msra.mxu0 %v663
        %745 = vmatprep.subr.bf16.mxu0 0
        %746 = vmatpush2.bf16.msra.mxu0 %v662
        %747 = vmatprep.subr.bf16.mxu0 0
        %748 = vmatpush2.bf16.msra.mxu0 %v661
        %749 = vmatprep.mubr.bf16.mxu0 %v462
        %750 = vmatmul.mubr.bf16.gmra.mxu0 %v461
        %v751 = vpop.f32.mrf.mxu0
        %v752 = vadd.f32 0.0, %v751
        %v753 = vpop.f32.mrf.mxu0
        %v754 = vpop.f32.mrf.mxu0
        %v755 = vadd.f32 0.0, %v754
        %v756 = vpop.f32.mrf.mxu0
        %757 = vmatprep.mubr.bf16.mxu0 %v466
        %758 = vmatmul.mubr.bf16.gmra.mxu0 %v465
        %v759 = vpop.f32.mrf.mxu0
        %v760 = vadd.f32 0.0, %v759
        %v761 = vpop.f32.mrf.mxu0
        %v762 = vpop.f32.mrf.mxu0
        %v763 = vadd.f32 0.0, %v762
        %v764 = vpop.f32.mrf.mxu0
        %765 = vmatprep.mubr.bf16.mxu0 %v470
        %766 = vmatmul.mubr.bf16.gmra.mxu0 %v469
        %v767 = vpop.f32.mrf.mxu0
        %v768 = vadd.f32 0.0, %v767
        %v769 = vpop.f32.mrf.mxu0
        %v770 = vpop.f32.mrf.mxu0
        %v771 = vadd.f32 0.0, %v770
        %v772 = vpop.f32.mrf.mxu0
        %773 = vmatprep.mubr.bf16.mxu0 %v474
        %774 = vmatmul.mubr.bf16.gmra.mxu0 %v473
        %v775 = vpop.f32.mrf.mxu0
        %v776 = vadd.f32 0.0, %v775
        %v777 = vpop.f32.mrf.mxu0
        %v778 = vpop.f32.mrf.mxu0
        %v779 = vadd.f32 0.0, %v778
        %v780 = vpop.f32.mrf.mxu0
        %781 = vmatprep.mubr.bf16.mxu0 %v478
        %782 = vmatmul.mubr.bf16.gmra.mxu0 %v477
        %v783 = vpop.f32.mrf.mxu0
        %v784 = vadd.f32 0.0, %v783
        %v785 = vpop.f32.mrf.mxu0
        %v786 = vpop.f32.mrf.mxu0
        %v787 = vadd.f32 0.0, %v786
        %v788 = vpop.f32.mrf.mxu0
        %789 = vmatprep.mubr.bf16.mxu0 %v482
        %790 = vmatmul.mubr.bf16.gmra.mxu0 %v481
        %v791 = vpop.f32.mrf.mxu0
        %v792 = vadd.f32 0.0, %v791
        %v793 = vpop.f32.mrf.mxu0
        %v794 = vpop.f32.mrf.mxu0
        %v795 = vadd.f32 0.0, %v794
        %v796 = vpop.f32.mrf.mxu0
        %797 = vmatprep.mubr.bf16.mxu0 %v486
        %798 = vmatmul.mubr.bf16.gmra.mxu0 %v485
        %v799 = vpop.f32.mrf.mxu0
        %v800 = vadd.f32 0.0, %v799
        %v801 = vpop.f32.mrf.mxu0
        %v802 = vpop.f32.mrf.mxu0
        %v803 = vadd.f32 0.0, %v802
        %v804 = vpop.f32.mrf.mxu0
        %805 = vmatprep.mubr.bf16.mxu0 %v490
        %806 = vmatmul.mubr.bf16.gmra.mxu0 %v489
        %v807 = vpop.f32.mrf.mxu0
        %v808 = vadd.f32 0.0, %v807
        %v809 = vpop.f32.mrf.mxu0
        %v810 = vpop.f32.mrf.mxu0
        %v811 = vadd.f32 0.0, %v810
        %v812 = vpop.f32.mrf.mxu0
        %813 = vdwg.mxu0
        %814 = vmatprep.subr.bf16.mxu0 0
        %815 = vmatpush1.bf16.msra.mxu0 %v676
        %816 = vmatprep.subr.bf16.mxu0 0
        %817 = vmatpush1.bf16.msra.mxu0 %v675
        %818 = vmatprep.subr.bf16.mxu0 0
        %819 = vmatpush1.bf16.msra.mxu0 %v674
        %820 = vmatprep.subr.bf16.mxu0 0
        %821 = vmatpush1.bf16.msra.mxu0 %v673
        %822 = vmatprep.subr.bf16.mxu0 0
        %823 = vmatpush1.bf16.msra.mxu0 %v672
        %824 = vmatprep.subr.bf16.mxu0 0
        %825 = vmatpush1.bf16.msra.mxu0 %v671
        %826 = vmatprep.subr.bf16.mxu0 0
        %827 = vmatpush1.bf16.msra.mxu0 %v670
        %828 = vmatprep.subr.bf16.mxu0 0
        %829 = vmatpush1.bf16.msra.mxu0 %v669
        %830 = vmatprep.subr.bf16.mxu0 0
        %831 = vmatpush2.bf16.msra.mxu0 %v684
        %832 = vmatprep.subr.bf16.mxu0 0
        %833 = vmatpush2.bf16.msra.mxu0 %v683
        %834 = vmatprep.subr.bf16.mxu0 0
        %835 = vmatpush2.bf16.msra.mxu0 %v682
        %836 = vmatprep.subr.bf16.mxu0 0
        %837 = vmatpush2.bf16.msra.mxu0 %v681
        %838 = vmatprep.subr.bf16.mxu0 0
        %839 = vmatpush2.bf16.msra.mxu0 %v680
        %840 = vmatprep.subr.bf16.mxu0 0
        %841 = vmatpush2.bf16.msra.mxu0 %v679
        %842 = vmatprep.subr.bf16.mxu0 0
        %843 = vmatpush2.bf16.msra.mxu0 %v678
        %844 = vmatprep.subr.bf16.mxu0 0
        %845 = vmatpush2.bf16.msra.mxu0 %v677
        %846 = vmatprep.mubr.bf16.mxu0 %v464
        %847 = vmatmul.mubr.bf16.gmra.mxu0 %v463
        %v848 = vpop.f32.mrf.mxu0
        %v849 = vadd.f32 %v752, %v848
        %v850 = vpop.f32.mrf.mxu0
        %v851 = vpop.f32.mrf.mxu0
        %v852 = vadd.f32 %v755, %v851
        %v853 = vpop.f32.mrf.mxu0
        %854 = vmatprep.mubr.bf16.mxu0 %v468
        %855 = vmatmul.mubr.bf16.gmra.mxu0 %v467
        %v856 = vpop.f32.mrf.mxu0
        %v857 = vadd.f32 %v760, %v856
        %v858 = vpop.f32.mrf.mxu0
        %v859 = vpop.f32.mrf.mxu0
        %v860 = vadd.f32 %v763, %v859
        %v861 = vpop.f32.mrf.mxu0
        %862 = vmatprep.mubr.bf16.mxu0 %v472
        %863 = vmatmul.mubr.bf16.gmra.mxu0 %v471
        %v864 = vpop.f32.mrf.mxu0
        %v865 = vadd.f32 %v768, %v864
        %v866 = vpop.f32.mrf.mxu0
        %v867 = vpop.f32.mrf.mxu0
        %v868 = vadd.f32 %v771, %v867
        %v869 = vpop.f32.mrf.mxu0
        %870 = vmatprep.mubr.bf16.mxu0 %v476
        %871 = vmatmul.mubr.bf16.gmra.mxu0 %v475
        %v872 = vpop.f32.mrf.mxu0
        %v873 = vadd.f32 %v776, %v872
        %v874 = vpop.f32.mrf.mxu0
        %v875 = vpop.f32.mrf.mxu0
        %v876 = vadd.f32 %v779, %v875
        %v877 = vpop.f32.mrf.mxu0
        %878 = vmatprep.mubr.bf16.mxu0 %v480
        %879 = vmatmul.mubr.bf16.gmra.mxu0 %v479
        %v880 = vpop.f32.mrf.mxu0
        %v881 = vadd.f32 %v784, %v880
        %v882 = vpop.f32.mrf.mxu0
        %v883 = vpop.f32.mrf.mxu0
        %v884 = vadd.f32 %v787, %v883
        %v885 = vpop.f32.mrf.mxu0
        %886 = vmatprep.mubr.bf16.mxu0 %v484
        %887 = vmatmul.mubr.bf16.gmra.mxu0 %v483
        %v888 = vpop.f32.mrf.mxu0
        %v889 = vadd.f32 %v792, %v888
        %v890 = vpop.f32.mrf.mxu0
        %v891 = vpop.f32.mrf.mxu0
        %v892 = vadd.f32 %v795, %v891
        %v893 = vpop.f32.mrf.mxu0
        %894 = vmatprep.mubr.bf16.mxu0 %v488
        %895 = vmatmul.mubr.bf16.gmra.mxu0 %v487
        %v896 = vpop.f32.mrf.mxu0
        %v897 = vadd.f32 %v800, %v896
        %v898 = vpop.f32.mrf.mxu0
        %v899 = vpop.f32.mrf.mxu0
        %v900 = vadd.f32 %v803, %v899
        %v901 = vpop.f32.mrf.mxu0
        %902 = vmatprep.mubr.bf16.mxu0 %v492
        %903 = vmatmul.mubr.bf16.gmra.mxu0 %v491
        %v904 = vpop.f32.mrf.mxu0
        %v905 = vadd.f32 %v808, %v904
        %v906 = vpop.f32.mrf.mxu0
        %v907 = vpop.f32.mrf.mxu0
        %v908 = vadd.f32 %v811, %v907
        %v909 = vpop.f32.mrf.mxu0
        %910 = vdwg.mxu0
        %v911 = vpack.c.bf16 %v852, %v849
        %v912 = vpack.c.bf16 %v860, %v857
        %v913 = vpack.c.bf16 %v868, %v865
        %v914 = vpack.c.bf16 %v876, %v873
        %v915 = vpack.c.bf16 %v884, %v881
        %v916 = vpack.c.bf16 %v892, %v889
        %v917 = vpack.c.bf16 %v900, %v897
        %v918 = vpack.c.bf16 %v908, %v905
        %v919 = vld [vmem:[%s2] sm:$0xf]
        %v920 = vld [vmem:[%s2 + $0x4] sm:$0xf]
        %v921 = vld [vmem:[%s2 + $0x8] sm:$0xf]
        %v922 = vld [vmem:[%s2 + $0xc] sm:$0xf]
        %v923 = vld [vmem:[%s2 + $0x10] sm:$0xf]
        %v924 = vld [vmem:[%s2 + $0x14] sm:$0xf]
        %v925 = vld [vmem:[%s2 + $0x18] sm:$0xf]
        %v926 = vld [vmem:[%s2 + $0x1c] sm:$0xf]
        %v927 = vld [vmem:[%s2 + $0x20] sm:$0xf]
        %v928 = vld [vmem:[%s2 + $0x24] sm:$0xf]
        %v929 = vld [vmem:[%s2 + $0x28] sm:$0xf]
        %v930 = vld [vmem:[%s2 + $0x2c] sm:$0xf]
        %v931 = vld [vmem:[%s2 + $0x30] sm:$0xf]
        %v932 = vld [vmem:[%s2 + $0x34] sm:$0xf]
        %v933 = vld [vmem:[%s2 + $0x38] sm:$0xf]
        %v934 = vld [vmem:[%s2 + $0x3c] sm:$0xf]
        %v951 = vunpack.c.l.b16 %v919
        %v952 = vunpack.c.l.b16 %v920
        %v953 = vunpack.c.l.b16 %v921
        %v954 = vunpack.c.l.b16 %v922
        %v955 = vunpack.c.l.b16 %v923
        %v956 = vunpack.c.l.b16 %v924
        %v957 = vunpack.c.l.b16 %v925
        %v958 = vunpack.c.l.b16 %v926
        %v959 = vunpack.c.l.b16 %v927
        %v960 = vunpack.c.l.b16 %v928
        %v961 = vunpack.c.l.b16 %v929
        %v962 = vunpack.c.l.b16 %v930
        %v963 = vunpack.c.l.b16 %v931
        %v964 = vunpack.c.l.b16 %v932
        %v965 = vunpack.c.l.b16 %v933
        %v966 = vunpack.c.l.b16 %v934
        %v967 = vpack.c.b16 %v952, %v951
        %v968 = vpack.c.b16 %v954, %v953
        %v969 = vpack.c.b16 %v956, %v955
        %v970 = vpack.c.b16 %v958, %v957
        %v971 = vpack.c.b16 %v960, %v959
        %v972 = vpack.c.b16 %v962, %v961
        %v973 = vpack.c.b16 %v964, %v963
        %v974 = vpack.c.b16 %v966, %v965
        %983 = vmatprep.subr.bf16.mxu0 0
        %984 = vmatpush1.bf16.msra.mxu0 %v974
        %985 = vmatprep.subr.bf16.mxu0 0
        %986 = vmatpush1.bf16.msra.mxu0 %v973
        %987 = vmatprep.subr.bf16.mxu0 0
        %988 = vmatpush1.bf16.msra.mxu0 %v972
        %989 = vmatprep.subr.bf16.mxu0 0
        %990 = vmatpush1.bf16.msra.mxu0 %v971
        %991 = vmatprep.subr.bf16.mxu0 0
        %992 = vmatpush1.bf16.msra.mxu0 %v970
        %993 = vmatprep.subr.bf16.mxu0 0
        %994 = vmatpush1.bf16.msra.mxu0 %v969
        %995 = vmatprep.subr.bf16.mxu0 0
        %996 = vmatpush1.bf16.msra.mxu0 %v968
        %997 = vmatprep.subr.bf16.mxu0 0
        %998 = vmatpush1.bf16.msra.mxu0 %v967
        %999 = vmatprep.subr.bf16.mxu0 0
        %1000 = vmatpush2.bf16.msra.mxu0 0
        %1001 = vmatprep.subr.bf16.mxu0 0
        %1002 = vmatpush2.bf16.msra.mxu0 0
        %1003 = vmatprep.subr.bf16.mxu0 0
        %1004 = vmatpush2.bf16.msra.mxu0 0
        %1005 = vmatprep.subr.bf16.mxu0 0
        %1006 = vmatpush2.bf16.msra.mxu0 0
        %1007 = vmatprep.subr.bf16.mxu0 0
        %1008 = vmatpush2.bf16.msra.mxu0 0
        %1009 = vmatprep.subr.bf16.mxu0 0
        %1010 = vmatpush2.bf16.msra.mxu0 0
        %1011 = vmatprep.subr.bf16.mxu0 0
        %1012 = vmatpush2.bf16.msra.mxu0 0
        %1013 = vmatprep.subr.bf16.mxu0 0
        %1014 = vmatpush2.bf16.msra.mxu0 0
        %1015 = vmatprep.mubr.bf16.mxu0 0
        %1016 = vmatmul.mubr.bf16.gmra.mxu0 %v911
        %v1017 = vpop.f32.mrf.mxu0
        %v1018 = vadd.f32 0.0, %v1017
        %v1019 = vpop.f32.mrf.mxu0
        %v1020 = vpop.f32.mrf.mxu0
        %v1021 = vadd.f32 0.0, %v1020
        %v1022 = vpop.f32.mrf.mxu0
        %1023 = vmatprep.mubr.bf16.mxu0 0
        %1024 = vmatmul.mubr.bf16.gmra.mxu0 %v912
        %v1025 = vpop.f32.mrf.mxu0
        %v1026 = vadd.f32 0.0, %v1025
        %v1027 = vpop.f32.mrf.mxu0
        %v1028 = vpop.f32.mrf.mxu0
        %v1029 = vadd.f32 0.0, %v1028
        %v1030 = vpop.f32.mrf.mxu0
        %1031 = vmatprep.mubr.bf16.mxu0 0
        %1032 = vmatmul.mubr.bf16.gmra.mxu0 %v913
        %v1033 = vpop.f32.mrf.mxu0
        %v1034 = vadd.f32 0.0, %v1033
        %v1035 = vpop.f32.mrf.mxu0
        %v1036 = vpop.f32.mrf.mxu0
        %v1037 = vadd.f32 0.0, %v1036
        %v1038 = vpop.f32.mrf.mxu0
        %1039 = vmatprep.mubr.bf16.mxu0 0
        %1040 = vmatmul.mubr.bf16.gmra.mxu0 %v914
        %v1041 = vpop.f32.mrf.mxu0
        %v1042 = vadd.f32 0.0, %v1041
        %v1043 = vpop.f32.mrf.mxu0
        %v1044 = vpop.f32.mrf.mxu0
        %v1045 = vadd.f32 0.0, %v1044
        %v1046 = vpop.f32.mrf.mxu0
        %1047 = vmatprep.mubr.bf16.mxu0 0
        %1048 = vmatmul.mubr.bf16.gmra.mxu0 %v915
        %v1049 = vpop.f32.mrf.mxu0
        %v1050 = vadd.f32 0.0, %v1049
        %v1051 = vpop.f32.mrf.mxu0
        %v1052 = vpop.f32.mrf.mxu0
        %v1053 = vadd.f32 0.0, %v1052
        %v1054 = vpop.f32.mrf.mxu0
        %1055 = vmatprep.mubr.bf16.mxu0 0
        %1056 = vmatmul.mubr.bf16.gmra.mxu0 %v916
        %v1057 = vpop.f32.mrf.mxu0
        %v1058 = vadd.f32 0.0, %v1057
        %v1059 = vpop.f32.mrf.mxu0
        %v1060 = vpop.f32.mrf.mxu0
        %v1061 = vadd.f32 0.0, %v1060
        %v1062 = vpop.f32.mrf.mxu0
        %1063 = vmatprep.mubr.bf16.mxu0 0
        %1064 = vmatmul.mubr.bf16.gmra.mxu0 %v917
        %v1065 = vpop.f32.mrf.mxu0
        %v1066 = vadd.f32 0.0, %v1065
        %v1067 = vpop.f32.mrf.mxu0
        %v1068 = vpop.f32.mrf.mxu0
        %v1069 = vadd.f32 0.0, %v1068
        %v1070 = vpop.f32.mrf.mxu0
        %1071 = vmatprep.mubr.bf16.mxu0 0
        %1072 = vmatmul.mubr.bf16.gmra.mxu0 %v918
        %v1073 = vpop.f32.mrf.mxu0
        %v1074 = vadd.f32 0.0, %v1073
        %v1075 = vpop.f32.mrf.mxu0
        %v1076 = vpop.f32.mrf.mxu0
        %v1077 = vadd.f32 0.0, %v1076
        %v1078 = vpop.f32.mrf.mxu0
        %1079 = vdwg.mxu0
        %v1080 = vld [vmem:[%s265] sm:$0xff]
        %v1081 = vld [vmem:[%s265 + $0x8] sm:$0xff]
        %v1082 = vld [vmem:[%s265 + $0x10] sm:$0xff]
        %v1083 = vld [vmem:[%s265 + $0x18] sm:$0xff]
        %v1084 = vld [vmem:[%s265 + $0x20] sm:$0xff]
        %v1085 = vld [vmem:[%s265 + $0x28] sm:$0xff]
        %v1086 = vld [vmem:[%s265 + $0x30] sm:$0xff]
        %v1087 = vld [vmem:[%s265 + $0x38] sm:$0xff]
        %v1088 = vld [vmem:[%s265 + $0x40] sm:$0xff]
        %v1089 = vld [vmem:[%s265 + $0x48] sm:$0xff]
        %v1090 = vld [vmem:[%s265 + $0x50] sm:$0xff]
        %v1091 = vld [vmem:[%s265 + $0x58] sm:$0xff]
        %v1092 = vld [vmem:[%s265 + $0x60] sm:$0xff]
        %v1093 = vld [vmem:[%s265 + $0x68] sm:$0xff]
        %v1094 = vld [vmem:[%s265 + $0x70] sm:$0xff]
        %v1095 = vld [vmem:[%s265 + $0x78] sm:$0xff]
        %1097 = vset.pattern.permute.xlu0 0
        %1098 = vperm.xlu0 %1097, %v1080
        %v1099 = vpop.permute.xlu0 %1098
        %1102 = vset.pattern.permute.xlu0 0
        %1103 = vperm.xlu0 %1102, %v1081
        %v1104 = vpop.permute.xlu0 %1103
        %1107 = vset.pattern.permute.xlu0 0
        %1108 = vperm.xlu0 %1107, %v1082
        %v1109 = vpop.permute.xlu0 %1108
        %1112 = vset.pattern.permute.xlu0 0
        %1113 = vperm.xlu0 %1112, %v1083
        %v1114 = vpop.permute.xlu0 %1113
        %1117 = vset.pattern.permute.xlu0 0
        %1118 = vperm.xlu0 %1117, %v1084
        %v1119 = vpop.permute.xlu0 %1118
        %1122 = vset.pattern.permute.xlu0 0
        %1123 = vperm.xlu0 %1122, %v1085
        %v1124 = vpop.permute.xlu0 %1123
        %1127 = vset.pattern.permute.xlu0 0
        %1128 = vperm.xlu0 %1127, %v1086
        %v1129 = vpop.permute.xlu0 %1128
        %1132 = vset.pattern.permute.xlu0 0
        %1133 = vperm.xlu0 %1132, %v1087
        %v1134 = vpop.permute.xlu0 %1133
        %1137 = vset.pattern.permute.xlu0 0
        %1138 = vperm.xlu0 %1137, %v1088
        %v1139 = vpop.permute.xlu0 %1138
        %1142 = vset.pattern.permute.xlu0 0
        %1143 = vperm.xlu0 %1142, %v1089
        %v1144 = vpop.permute.xlu0 %1143
        %1147 = vset.pattern.permute.xlu0 0
        %1148 = vperm.xlu0 %1147, %v1090
        %v1149 = vpop.permute.xlu0 %1148
        %1152 = vset.pattern.permute.xlu0 0
        %1153 = vperm.xlu0 %1152, %v1091
        %v1154 = vpop.permute.xlu0 %1153
        %1157 = vset.pattern.permute.xlu0 0
        %1158 = vperm.xlu0 %1157, %v1092
        %v1159 = vpop.permute.xlu0 %1158
        %1162 = vset.pattern.permute.xlu0 0
        %1163 = vperm.xlu0 %1162, %v1093
        %v1164 = vpop.permute.xlu0 %1163
        %1167 = vset.pattern.permute.xlu0 0
        %1168 = vperm.xlu0 %1167, %v1094
        %v1169 = vpop.permute.xlu0 %1168
        %1172 = vset.pattern.permute.xlu0 0
        %1173 = vperm.xlu0 %1172, %v1095
        %v1174 = vpop.permute.xlu0 %1173
        %v1176 = vmul.f32 %v1099, %v1018
        %v1177 = vmul.f32 %v1104, %v1021
        %v1178 = vmul.f32 %v1109, %v1026
        %v1179 = vmul.f32 %v1114, %v1029
        %v1180 = vmul.f32 %v1119, %v1034
        %v1181 = vmul.f32 %v1124, %v1037
        %v1182 = vmul.f32 %v1129, %v1042
        %v1183 = vmul.f32 %v1134, %v1045
        %v1184 = vmul.f32 %v1139, %v1050
        %v1185 = vmul.f32 %v1144, %v1053
        %v1186 = vmul.f32 %v1149, %v1058
        %v1187 = vmul.f32 %v1154, %v1061
        %v1188 = vmul.f32 %v1159, %v1066
        %v1189 = vmul.f32 %v1164, %v1069
        %v1190 = vmul.f32 %v1169, %v1074
        %v1191 = vmul.f32 %v1174, %v1077
        %v1192 = vld [vmem:[%s3] sm:$0x1]
        %v1194 = vlaneseq
        %v1195 = vshrl.u32 %v1194, 7
        %v1196 = vsub.s32 0, %v1195
        %v1197 = vrot.slane %v1192, %v1196
        %v1199 = vadd.f32 %v1176, %v1197
        %v1200 = vadd.f32 %v1177, %v1197
        %v1201 = vadd.f32 %v1178, %v1197
        %v1202 = vadd.f32 %v1179, %v1197
        %v1203 = vadd.f32 %v1180, %v1197
        %v1204 = vadd.f32 %v1181, %v1197
        %v1205 = vadd.f32 %v1182, %v1197
        %v1206 = vadd.f32 %v1183, %v1197
        %v1207 = vadd.f32 %v1184, %v1197
        %v1208 = vadd.f32 %v1185, %v1197
        %v1209 = vadd.f32 %v1186, %v1197
        %v1210 = vadd.f32 %v1187, %v1197
        %v1211 = vadd.f32 %v1188, %v1197
        %v1212 = vadd.f32 %v1189, %v1197
        %v1213 = vadd.f32 %v1190, %v1197
        %v1214 = vadd.f32 %v1191, %v1197
        %v1215 = vmax.f32 %v1199, 0.0
        %v1216 = vmax.f32 %v1200, 0.0
        %v1217 = vmax.f32 %v1201, 0.0
        %v1218 = vmax.f32 %v1202, 0.0
        %v1219 = vmax.f32 %v1203, 0.0
        %v1220 = vmax.f32 %v1204, 0.0
        %v1221 = vmax.f32 %v1205, 0.0
        %v1222 = vmax.f32 %v1206, 0.0
        %v1223 = vmax.f32 %v1207, 0.0
        %v1224 = vmax.f32 %v1208, 0.0
        %v1225 = vmax.f32 %v1209, 0.0
        %v1226 = vmax.f32 %v1210, 0.0
        %v1227 = vmax.f32 %v1211, 0.0
        %v1228 = vmax.f32 %v1212, 0.0
        %v1229 = vmax.f32 %v1213, 0.0
        %v1230 = vmax.f32 %v1214, 0.0
        %v1231 = vmul.f32 %v1099, %v1215
        %v1232 = vmul.f32 %v1104, %v1216
        %v1233 = vmul.f32 %v1109, %v1217
        %v1234 = vmul.f32 %v1114, %v1218
        %v1235 = vmul.f32 %v1119, %v1219
        %v1236 = vmul.f32 %v1124, %v1220
        %v1237 = vmul.f32 %v1129, %v1221
        %v1238 = vmul.f32 %v1134, %v1222
        %v1239 = vmul.f32 %v1139, %v1223
        %v1240 = vmul.f32 %v1144, %v1224
        %v1241 = vmul.f32 %v1149, %v1225
        %v1242 = vmul.f32 %v1154, %v1226
        %v1243 = vmul.f32 %v1159, %v1227
        %v1244 = vmul.f32 %v1164, %v1228
        %v1245 = vmul.f32 %v1169, %v1229
        %v1246 = vmul.f32 %v1174, %v1230
        %v1247 = vpack.c.bf16 %v1232, %v1231
        %v1248 = vpack.c.bf16 %v1234, %v1233
        %v1249 = vpack.c.bf16 %v1236, %v1235
        %v1250 = vpack.c.bf16 %v1238, %v1237
        %v1251 = vpack.c.bf16 %v1240, %v1239
        %v1252 = vpack.c.bf16 %v1242, %v1241
        %v1253 = vpack.c.bf16 %v1244, %v1243
        %v1254 = vpack.c.bf16 %v1246, %v1245
        %v1263 = vunpack.c.l.b16 %v1247
        %v1264 = vunpack.c.h.b16 %v1247
        %v1265 = vunpack.c.l.b16 %v1248
        %v1266 = vunpack.c.h.b16 %v1248
        %v1267 = vunpack.c.l.b16 %v1249
        %v1268 = vunpack.c.h.b16 %v1249
        %v1269 = vunpack.c.l.b16 %v1250
        %v1270 = vunpack.c.h.b16 %v1250
        %v1271 = vunpack.c.l.b16 %v1251
        %v1272 = vunpack.c.h.b16 %v1251
        %v1273 = vunpack.c.l.b16 %v1252
        %v1274 = vunpack.c.h.b16 %v1252
        %v1275 = vunpack.c.l.b16 %v1253
        %v1276 = vunpack.c.h.b16 %v1253
        %v1277 = vunpack.c.l.b16 %v1254
        %v1278 = vunpack.c.h.b16 %v1254
        %v1279 = vpack.c.b16 %v1263, %v1263
        %v1280 = vpack.c.b16 %v1264, %v1264
        %v1281 = vpack.c.b16 %v1265, %v1265
        %v1282 = vpack.c.b16 %v1266, %v1266
        %v1283 = vpack.c.b16 %v1267, %v1267
        %v1284 = vpack.c.b16 %v1268, %v1268
        %v1285 = vpack.c.b16 %v1269, %v1269
        %v1286 = vpack.c.b16 %v1270, %v1270
        %v1287 = vpack.c.b16 %v1271, %v1271
        %v1288 = vpack.c.b16 %v1272, %v1272
        %v1289 = vpack.c.b16 %v1273, %v1273
        %v1290 = vpack.c.b16 %v1274, %v1274
        %v1291 = vpack.c.b16 %v1275, %v1275
        %v1292 = vpack.c.b16 %v1276, %v1276
        %v1293 = vpack.c.b16 %v1277, %v1277
        %v1294 = vpack.c.b16 %v1278, %v1278
        %1311 = vst [vmem:[%s259] sm:$0xf] %v1279
        %1312 = vst [vmem:[%s259 + $0x4] sm:$0xf] %v1280
        %1313 = vst [vmem:[%s259 + $0x8] sm:$0xf] %v1281
        %1314 = vst [vmem:[%s259 + $0xc] sm:$0xf] %v1282
        %1315 = vst [vmem:[%s259 + $0x10] sm:$0xf] %v1283
        %1316 = vst [vmem:[%s259 + $0x14] sm:$0xf] %v1284
        %1317 = vst [vmem:[%s259 + $0x18] sm:$0xf] %v1285
        %1318 = vst [vmem:[%s259 + $0x1c] sm:$0xf] %v1286
        %1319 = vst [vmem:[%s259 + $0x20] sm:$0xf] %v1287
        %1320 = vst [vmem:[%s259 + $0x24] sm:$0xf] %v1288
        %1321 = vst [vmem:[%s259 + $0x28] sm:$0xf] %v1289
        %1322 = vst [vmem:[%s259 + $0x2c] sm:$0xf] %v1290
        %1323 = vst [vmem:[%s259 + $0x30] sm:$0xf] %v1291
        %1324 = vst [vmem:[%s259 + $0x34] sm:$0xf] %v1292
        %1325 = vst [vmem:[%s259 + $0x38] sm:$0xf] %v1293
        %1326 = vst [vmem:[%s259 + $0x3c] sm:$0xf] %v1294
        %s1327 = sand.u32 %s145, 1
        %s1328 = scalar_lea.sflag [#allocation4], %s1327
        %s1329 = sand.u32 %s145, 1
        %s1330 = smul.addr %s1329, 64
        %s1331 = scalar_lea.vmem [#allocation5], %s1330
        // Predicated region
        $region45: #{tpu_custom_call.1} parent=39 // pred_check
          %p1332 = pneg %p155
        $region46: #{tpu_custom_call.1} parent=39 // pred_check_branch
          %1334 = sbr.rel (%p1332) target = $region48
        $region47: #{tpu_custom_call.1} parent=39 // pred_region
          %s1335 = smul.u32 16, %s22
          %s1337 = ssub.s32 1024, 1024
          %1338 = vsyncadd %s1328, %s1337
          %s1339 = smul.addr %s1335, 64
          %s1340 = scalar_lea.hbm %s5, %s1339
          %s1341 = sshll.u32 %s1331, 4
          %s1342 = int_to_ptr.vmem [resolvable:$true] %s1341
          %1347 = dma.vmem_to_hbm [thread:$0]  %s1342, 1024, %s1340, %s1328, 64, 64, 4
        $region48: #{tpu_custom_call.1} parent=39 // pred_fallthru
          _
      $region40: #{tpu_custom_call.1} parent=5 // pred_fallthru
        _
      %p1348 = scmp.le.s32.totalorder 2, %s17
      // Predicated region
      $region49: #{tpu_custom_call.1} parent=5 // pred_check
        %p1349 = pneg %p1348
      $region50: #{tpu_custom_call.1} parent=5 // pred_check_branch
        %1351 = sbr.rel (%p1349) target = $region52
      $region51: #{tpu_custom_call.1} parent=5 // pred_region
        %s1352 = ssub.s32 %s17, 2
        // Predicated region
        $region53: #{tpu_custom_call.1} parent=51 // pred_check
          %p1353 = pneg %p161
        $region54: #{tpu_custom_call.1} parent=51 // pred_check_branch
          %1355 = sbr.rel (%p1353) target = $region56
        $region55: #{tpu_custom_call.1} parent=51 // pred_region
          %s1356 = sand.u32 %s146, 1
          %s1357 = scalar_lea.sflag [#allocation4], %s1356
          %s1358 = sand.u32 %s146, 1
          %s1359 = smul.addr %s1358, 64
          %s1360 = scalar_lea.vmem [#allocation5], %s1359
          %1361 = dma.done %s1357, 1024
        $region56: #{tpu_custom_call.1} parent=51 // pred_fallthru
          _
      $region52: #{tpu_custom_call.1} parent=5 // pred_fallthru
        _
    $region6: #{tpu_custom_call.1} parent=1 // loop_footer
      %s21 = sadd.s32 1, %s17
    $region7: #{tpu_custom_call.1} parent=1 // loop_footer_branch
      %16 = sbr.rel target = $region3
    $region8: #{tpu_custom_call.1} parent=1 // loop_exit
      _
    %1362 = vsyncpa [#allocation3], 1
    %s1363 = scalar_lea.sflag [#allocation3], 1
    %1364 = vsyncpa %s1363, 1
    %1365 = vsyncpa [#allocation4], 1
    %s1366 = scalar_lea.sflag [#allocation4], 1
    %1367 = vsyncpa %s1366, 1

</llo_original>
